<compile_context>
chip_gen: v7x
topology: tpu7x:2x2x1
jax: 0.10.0
libtpu: 0.0.40
codegen_flags: <defaults>
</compile_context>

<pallas_src>
import functools

import jax
import jax.numpy as jnp
from jax.experimental import pallas as pl
from jax.experimental.pallas import tpu as pltpu


_VMEM_LIMIT = 48 * 1024 * 1024
_FUSED_MAX_NODES = 1024          # n_pad threshold for the single-call fused path


def _round_up(v, m):
    return ((v + m - 1) // m) * m


def _pad2d(x, rows, cols):
    return jnp.pad(x, ((0, rows - x.shape[0]), (0, cols - x.shape[1])))


def _choose_tiles(n):
    """Padded node count and (row tile, reduction tile) for the streamed path.

    Bigger k-tiles amortize the ~0.35us per-grid-step overhead against the A_hat
    DMA (the dominant HBM traffic), while keeping padding waste bounded for
    moderate graphs.  tk is always a multiple of tm so both divide n_pad.
    """
    tm = 512
    if n >= 8192:
        tk = 2048
    elif n >= 2048:
        tk = 1024
    else:
        tk = 512
    n_pad = _round_up(n, tk)
    return n_pad, tm, tk


# ---------------------------------------------------------------------------
# Kernels
# ---------------------------------------------------------------------------

def _fused_kernel(a_ref, x_ref, w1_ref, b1_ref, w2_ref, b2_ref, o_ref):
    """Whole GCN forward for graphs that fit in VMEM: 4 chained MXU matmuls."""
    xw1 = jnp.dot(x_ref[...], w1_ref[...], preferred_element_type=jnp.float32)
    h = jnp.dot(a_ref[...], xw1.astype(jnp.bfloat16),
                preferred_element_type=jnp.float32)
    h = jnp.maximum(h + b1_ref[...], 0.0)              # conv1 bias + relu
    # F.dropout(p=0.5, training=False) is the identity in eval mode.
    hw2 = jnp.dot(h.astype(jnp.bfloat16), w2_ref[...],
                  preferred_element_type=jnp.float32)
    out = jnp.dot(a_ref[...], hw2.astype(jnp.bfloat16),
                  preferred_element_type=jnp.float32)
    o_ref[...] = out + b2_ref[...]                      # conv2 bias


def gcn_fused(a, x, w1, b1, w2, b2):
    """Single-launch fused path: everything resident in VMEM, no intermediate HBM."""
    n_pad = a.shape[0]
    co = w2.shape[1]
    return pl.pallas_call(
        _fused_kernel,
        out_shape=jax.ShapeDtypeStruct((n_pad, co), jnp.float32),
        compiler_params=pltpu.CompilerParams(vmem_limit_bytes=_VMEM_LIMIT),
    )(a, x, w1, b1, w2, b2)


def _transform_kernel(x_ref, w_ref, o_ref):
    # (tm, f_in) @ (f_in, f_out) on the MXU, f32 accumulate, bf16 store.
    o_ref[...] = jnp.dot(
        x_ref[...], w_ref[...], preferred_element_type=jnp.float32
    ).astype(o_ref.dtype)


def transform(x, w, *, tm, out_dtype=jnp.bfloat16):
    """Row-tiled feature transform X @ W (hoisted out of the aggregation loop)."""
    n, f_in = x.shape
    f_out = w.shape[1]
    return pl.pallas_call(
        _transform_kernel,
        out_shape=jax.ShapeDtypeStruct((n, f_out), out_dtype),
        grid=(n // tm,),
        in_specs=[
            pl.BlockSpec((tm, f_in), lambda i: (i, 0)),
            pl.BlockSpec((f_in, f_out), lambda i: (0, 0)),
        ],
        out_specs=pl.BlockSpec((tm, f_out), lambda i: (i, 0)),
        compiler_params=pltpu.CompilerParams(
            dimension_semantics=("parallel",),
            vmem_limit_bytes=_VMEM_LIMIT,
        ),
    )(x, w)


def _aggregate_kernel(*refs, apply_relu, fuse_next):
    if fuse_next:
        a_ref, xw_ref, b_ref, w_next_ref, o_ref, acc_ref = refs
    else:
        a_ref, xw_ref, b_ref, o_ref, acc_ref = refs
        w_next_ref = None
    k = pl.program_id(1)

    @pl.when(k == 0)
    def _init():
        acc_ref[...] = jnp.zeros_like(acc_ref)

    # Streaming aggregation: (tm, tk) bf16 @ (tk, f) bf16 -> f32 accumulator.
    acc_ref[...] += jnp.dot(
        a_ref[...], xw_ref[...], preferred_element_type=jnp.float32
    )

    @pl.when(k == pl.num_programs(1) - 1)
    def _finalize():
        h = acc_ref[...] + b_ref[...]
        if apply_relu:
            h = jnp.maximum(h, 0.0)
        if fuse_next:
            # Fused next-layer feature transform: (tm, f) @ (f, f_next) on the MXU.
            h = jnp.dot(
                h.astype(jnp.bfloat16), w_next_ref[...],
                preferred_element_type=jnp.float32,
            )
        o_ref[...] = h.astype(o_ref.dtype)


def aggregate(a, xw, b, *, tm, tk, apply_relu, w_next=None, out_dtype=jnp.float32):
    """out = [relu](A @ XW + b) [@ W_next], tiled over (row tiles, reduction tiles)."""
    n_pad = a.shape[0]
    f = xw.shape[1]
    fuse = w_next is not None
    f_out = w_next.shape[1] if fuse else f
    kernel = functools.partial(_aggregate_kernel, apply_relu=apply_relu,
                               fuse_next=fuse)
    in_specs = [
        pl.BlockSpec((tm, tk), lambda i, k: (i, k)),   # A row/k tile (bf16 stream)
        pl.BlockSpec((tk, f), lambda i, k: (k, 0)),    # XW k tile (lane-dense)
        pl.BlockSpec((1, f), lambda i, k: (0, 0)),     # bias (f32, DMA'd once)
    ]
    operands = [a, xw, b]
    if fuse:
        in_specs.append(pl.BlockSpec((f, f_out), lambda i, k: (0, 0)))
        operands.append(w_next)
    return pl.pallas_call(
        kernel,
        out_shape=jax.ShapeDtypeStruct((n_pad, f_out), out_dtype),
        grid=(n_pad // tm, n_pad // tk),
        in_specs=in_specs,
        out_specs=pl.BlockSpec((tm, f_out), lambda i, k: (i, 0)),
        scratch_shapes=[pltpu.VMEM((tm, f), jnp.float32)],
        compiler_params=pltpu.CompilerParams(
            dimension_semantics=("parallel", "arbitrary"),
            vmem_limit_bytes=_VMEM_LIMIT,
        ),
    )(*operands)


# ---------------------------------------------------------------------------
# Graph glue + forward
# ---------------------------------------------------------------------------

def build_normalized_adjacency(edge_index, num_nodes):
    """Dense A_hat = D^{-1/2} (A + I) D^{-1/2}, PyG GCNConv gcn_norm convention."""
    src, dst = edge_index[0], edge_index[1]
    a = jnp.zeros((num_nodes, num_nodes), jnp.float32)
    # scatter-ADD so duplicate/parallel edges are counted like PyG's scatter_add.
    a = a.at[dst, src].add(1.0)
    # add_remaining_self_loops: weight-1 self loop only where none exists.
    has_self = jnp.diagonal(a) > 0.0
    a = a + jnp.diag(jnp.where(has_self, 0.0, 1.0))
    deg = a.sum(axis=1)
    deg_inv_sqrt = jnp.where(deg > 0.0, jax.lax.rsqrt(deg), 0.0)
    return deg_inv_sqrt[:, None] * a * deg_inv_sqrt[None, :]


@functools.partial(jax.jit, static_argnames=("num_nodes",))
def gcn_forward(x, edge_index, w1, b1, w2, b2, *, num_nodes):
    n = num_nodes
    c_in, c_hid = w1.shape
    c_out = w2.shape[1]

    fused = n <= _FUSED_MAX_NODES
    if fused:
        n_pad = _round_up(max(n, 8), 128)
        tm = tk = n_pad
    else:
        n_pad, tm, tk = _choose_tiles(n)

    ci = _round_up(c_in, 128)
    ch = _round_up(c_hid, 128)
    co = _round_up(c_out, 128)

    a_hat = build_normalized_adjacency(edge_index, n)

    # Lane-dense, zero-padded, bf16 operands (halves the dominant A_hat HBM traffic;
    # zero padding is exact for this linear + relu pipeline).
    a_p = _pad2d(a_hat, n_pad, n_pad).astype(jnp.bfloat16)
    x_p = _pad2d(x, n_pad, ci).astype(jnp.bfloat16)
    w1_p = _pad2d(w1, ci, ch).astype(jnp.bfloat16)
    w2_p = _pad2d(w2, ch, co).astype(jnp.bfloat16)
    b1_p = _pad2d(jnp.asarray(b1, jnp.float32).reshape(1, -1), 1, ch)
    b2_p = _pad2d(jnp.asarray(b2, jnp.float32).reshape(1, -1), 1, co)

    # F.dropout(p=0.5, training=False) is the identity in eval mode.
    # TODO(synk): training-mode dropout would use pltpu.prng_seed/prng_random_bits in-kernel.
    if fused:
        # Whole graph fits in VMEM: one launch, zero intermediate HBM traffic.
        out = gcn_fused(a_p, x_p, w1_p, b1_p, w2_p, b2_p)           # f32 [n_pad, co]
    else:
        # Layer 1 feature transform (hoisted; computed once, not per A tile).
        xw1 = transform(x_p, w1_p, tm=tm)                            # bf16 [n_pad, ch]
        # Layer 1 aggregation + bias + relu, with layer 2's feature transform fused into
        # the epilogue => hidden activations never round-trip to HBM at width ch.
        hw2 = aggregate(a_p, xw1, b1_p, tm=tm, tk=tk, apply_relu=True,
                        w_next=w2_p, out_dtype=jnp.bfloat16)         # bf16 [n_pad, co]
        # Layer 2 aggregation + bias.
        out = aggregate(a_p, hw2, b2_p, tm=tm, tk=tk, apply_relu=False,
                        out_dtype=jnp.float32)                       # f32 [n_pad, co]
    return out[:n, :c_out]


def _glorot(key, shape):
    limit = jnp.sqrt(6.0 / (shape[0] + shape[1]))
    return jax.random.uniform(key, shape, jnp.float32, -limit, limit)


def _ring_edge_index(n):
    """Deterministic undirected ring graph (both edge directions), edge_index [2, 2n]."""
    s = jnp.arange(n, dtype=jnp.int32)
    d = (s + 1) % n
    return jnp.stack([jnp.concatenate([s, d]), jnp.concatenate([d, s])], axis=0)


def _reference(x, edge_index, w1, b1, w2, b2, n):
    a_ref = build_normalized_adjacency(edge_index, n)
    h_ref = jnp.maximum(a_ref @ (x @ w1) + b1[None, :], 0.0)
    return a_ref @ (h_ref @ w2) + b2[None, :]


def _run_case(key, n, c_in, c_hid, c_out):
    k_x, k_w1, k_w2 = jax.random.split(key, 3)
    x = jax.random.normal(k_x, (n, c_in), dtype=jnp.float32)
    edge_index = _ring_edge_index(n)
    # GCNConv params: glorot-uniform weights, zero bias (PyG defaults), deterministic seed.
    w1 = _glorot(k_w1, (c_in, c_hid))
    b1 = jnp.zeros((c_hid,), jnp.float32)
    w2 = _glorot(k_w2, (c_hid, c_out))
    b2 = jnp.zeros((c_out,), jnp.float32)

    out = gcn_forward(x, edge_index, w1, b1, w2, b2, num_nodes=n)
    out = jax.block_until_ready(out)
    assert out.shape == (n, c_out)

    # Pure-JAX f32 reference (bf16 kernel path => loose tolerance).
    ref = _reference(x, edge_index, w1, b1, w2, b2, n)
    max_err = float(jnp.max(jnp.abs(out - ref)))
    tol = 5e-2 * max(1.0, float(jnp.max(jnp.abs(ref))))
    assert max_err < tol, f"N={n}: max abs error {max_err} (tol {tol})"


if __name__ == "__main__":
    key = jax.random.PRNGKey(0)
    k_small, k_large = jax.random.split(key, 2)

    # Small graph (exercises the fully-fused single-launch path).
    _run_case(k_small, n=16, c_in=8, c_hid=32, c_out=4)

    # Moderate graph (exercises the tiled/streamed accumulation path).
    _run_case(k_large, n=1200, c_in=16, c_hid=32, c_out=8)

    print("KERNEL_OK")
</pallas_src>

<mosaic_0001>
module attributes {stable_mosaic.version = 11 : i64} {
  func.func private @main(%arg0: i32) attributes {dimension_semantics = [#tpu.dimension_semantics<core_parallel>], iteration_bounds = array<i64: 2>, tpu.core_type = #tpu.core_type<sc_scalar_subcore>, window_params = []} {
    return
  }
}

module attributes {stable_mosaic.version = 11 : i64} {
  func.func private @main(%arg0: i32) attributes {dimension_semantics = [#tpu.dimension_semantics<core_parallel>], iteration_bounds = array<i64: 2>, tpu.core_type = #tpu.core_type<sc_scalar_subcore>, window_params = []} {
    return
  }
}

module attributes {stable_mosaic.version = 11 : i64} {
  func.func @_fused_kernel(%arg0: memref<128x128xbf16, #tpu.memory_space<vmem>>, %arg1: memref<128x128xbf16, #tpu.memory_space<vmem>>, %arg2: memref<128x128xbf16, #tpu.memory_space<vmem>>, %arg3: memref<1x128xf32, #tpu.memory_space<vmem>>, %arg4: memref<128x128xbf16, #tpu.memory_space<vmem>>, %arg5: memref<1x128xf32, #tpu.memory_space<vmem>>, %arg6: memref<128x128xf32, #tpu.memory_space<vmem>>) attributes {dimension_semantics = [], scalar_prefetch = 0 : i64, scratch_operands = 0 : i64, tpu.core_type = #tpu.core_type<tc>} {
    %c0 = arith.constant 0 : index
    %c0_0 = arith.constant 0 : index
    %0 = vector.load %arg1[%c0, %c0_0] : memref<128x128xbf16, #tpu.memory_space<vmem>>, vector<128x128xbf16>
    %c0_1 = arith.constant 0 : index
    %c0_2 = arith.constant 0 : index
    %1 = vector.load %arg2[%c0_1, %c0_2] : memref<128x128xbf16, #tpu.memory_space<vmem>>, vector<128x128xbf16>
    %cst = arith.constant dense<0.000000e+00> : vector<128x128xf32>
    %2 = tpu.matmul %0, %1, %cst {dimension_numbers = #tpu.dot_dimension_numbers<[1], [0], [0], [1], [0, 0, 1, 1], [], []>} : vector<128x128xbf16>, vector<128x128xbf16>, vector<128x128xf32> -> vector<128x128xf32>
    %c0_3 = arith.constant 0 : index
    %c0_4 = arith.constant 0 : index
    %3 = vector.load %arg0[%c0_3, %c0_4] : memref<128x128xbf16, #tpu.memory_space<vmem>>, vector<128x128xbf16>
    %4 = arith.truncf %2 : vector<128x128xf32> to vector<128x128xbf16>
    %cst_5 = arith.constant dense<0.000000e+00> : vector<128x128xf32>
    %5 = tpu.matmul %3, %4, %cst_5 {dimension_numbers = #tpu.dot_dimension_numbers<[1], [0], [0], [1], [0, 0, 1, 1], [], []>} : vector<128x128xbf16>, vector<128x128xbf16>, vector<128x128xf32> -> vector<128x128xf32>
    %c0_6 = arith.constant 0 : index
    %c0_7 = arith.constant 0 : index
    %6 = vector.load %arg3[%c0_6, %c0_7] : memref<1x128xf32, #tpu.memory_space<vmem>>, vector<1x128xf32>
    %7 = vector.broadcast %6 : vector<1x128xf32> to vector<128x128xf32>
    %8 = arith.addf %5, %7 : vector<128x128xf32>
    %cst_8 = arith.constant 0.000000e+00 : f32
    %9 = vector.broadcast %cst_8 : f32 to vector<128x128xf32>
    %10 = arith.maximumf %8, %9 : vector<128x128xf32>
    %11 = arith.truncf %10 : vector<128x128xf32> to vector<128x128xbf16>
    %c0_9 = arith.constant 0 : index
    %c0_10 = arith.constant 0 : index
    %12 = vector.load %arg4[%c0_9, %c0_10] : memref<128x128xbf16, #tpu.memory_space<vmem>>, vector<128x128xbf16>
    %cst_11 = arith.constant dense<0.000000e+00> : vector<128x128xf32>
    %13 = tpu.matmul %11, %12, %cst_11 {dimension_numbers = #tpu.dot_dimension_numbers<[1], [0], [0], [1], [0, 0, 1, 1], [], []>} : vector<128x128xbf16>, vector<128x128xbf16>, vector<128x128xf32> -> vector<128x128xf32>
    %c0_12 = arith.constant 0 : index
    %c0_13 = arith.constant 0 : index
    %14 = vector.load %arg0[%c0_12, %c0_13] : memref<128x128xbf16, #tpu.memory_space<vmem>>, vector<128x128xbf16>
    %15 = arith.truncf %13 : vector<128x128xf32> to vector<128x128xbf16>
    %cst_14 = arith.constant dense<0.000000e+00> : vector<128x128xf32>
    %16 = tpu.matmul %14, %15, %cst_14 {dimension_numbers = #tpu.dot_dimension_numbers<[1], [0], [0], [1], [0, 0, 1, 1], [], []>} : vector<128x128xbf16>, vector<128x128xbf16>, vector<128x128xf32> -> vector<128x128xf32>
    %c0_15 = arith.constant 0 : index
    %c0_16 = arith.constant 0 : index
    %17 = vector.load %arg5[%c0_15, %c0_16] : memref<1x128xf32, #tpu.memory_space<vmem>>, vector<1x128xf32>
    %18 = vector.broadcast %17 : vector<1x128xf32> to vector<128x128xf32>
    %19 = arith.addf %16, %18 : vector<128x128xf32>
    %c0_17 = arith.constant 0 : index
    %c0_18 = arith.constant 0 : index
    %20 = vector.load %arg6[%c0_17, %c0_18] : memref<128x128xf32, #tpu.memory_space<vmem>>, vector<128x128xf32>
    tpu.vector_store %arg6[%c0_17, %c0_18], %19 {strides = array<i32>} : memref<128x128xf32, #tpu.memory_space<vmem>>, vector<128x128xf32>,
    return
  }
}

</mosaic_0001>

<llo_original>
// kernel: gcn_forward.1
$region0: #{gcn_forward.1}
  #allocation0 [shape = 'u32[]', space=smem, size = 0x4, offset = 0x4, fixed_abs, tag = 'smem constant byte address 0x4 - core index']
  #allocation1 [shape = 'u32[144,128]{1,0:T(1,128)}', space=vmem, size = 0x12000, scoped, tag = 'internal scratch']
  %s0 = inlined_call_operand.vmem [shape: bf16[128,128], index: 0, kind: input, shape index: {}]
  %s1 = inlined_call_operand.vmem [shape: bf16[128,128], index: 1, kind: input, shape index: {}]
  %s2 = inlined_call_operand.vmem [shape: bf16[128,128], index: 2, kind: input, shape index: {}]
  %s3 = inlined_call_operand.vmem [shape: f32[1,128], index: 3, kind: input, shape index: {}]
  %s4 = inlined_call_operand.vmem [shape: bf16[128,128], index: 4, kind: input, shape index: {}]
  %s5 = inlined_call_operand.vmem [shape: f32[1,128], index: 5, kind: input, shape index: {}]
  %s6 = inlined_call_operand.vmem [shape: f32[128,128], index: 6, kind: output, shape index: {}]
  %s7 = sld [smem:[#allocation0]]
  $region34: #{gcn_forward.1} parent=0
    _
  %s9 = ssub.s32 1, %s7
  %s10 = scalar_select 0, %s9, %s7
  // Predicated region
  $region2: #{gcn_forward.1} parent=0 // pred_check
    _
  $region3: #{gcn_forward.1} parent=0 // pred_check_branch
    %12 = sbr.rel (0) target = $region5
  $region4: #{gcn_forward.1} parent=0 // pred_region
    _
  $region5: #{gcn_forward.1} parent=0 // pred_fallthru
    _
  // Predicated region
  $region6: #{gcn_forward.1} parent=0 // pred_check
    _
  $region7: #{gcn_forward.1} parent=0 // pred_check_branch
    %14 = sbr.rel (0) target = $region9
  $region8: #{gcn_forward.1} parent=0 // pred_region
    _
  $region9: #{gcn_forward.1} parent=0 // pred_fallthru
    _
  // Predicated region
  $region10: #{gcn_forward.1} parent=0 // pred_check
    _
  $region11: #{gcn_forward.1} parent=0 // pred_check_branch
    %16 = sbr.rel (0) target = $region13
  $region12: #{gcn_forward.1} parent=0 // pred_region
    _
  $region13: #{gcn_forward.1} parent=0 // pred_fallthru
    _
  // Predicated region
  $region14: #{gcn_forward.1} parent=0 // pred_check
    _
  $region15: #{gcn_forward.1} parent=0 // pred_check_branch
    %18 = sbr.rel (0) target = $region17
  $region16: #{gcn_forward.1} parent=0 // pred_region
    _
  $region17: #{gcn_forward.1} parent=0 // pred_fallthru
    _
  // Predicated region
  $region18: #{gcn_forward.1} parent=0 // pred_check
    _
  $region19: #{gcn_forward.1} parent=0 // pred_check_branch
    %20 = sbr.rel (0) target = $region21
  $region20: #{gcn_forward.1} parent=0 // pred_region
    _
  $region21: #{gcn_forward.1} parent=0 // pred_fallthru
    _
  // Predicated region
  $region22: #{gcn_forward.1} parent=0 // pred_check
    _
  $region23: #{gcn_forward.1} parent=0 // pred_check_branch
    %22 = sbr.rel (0) target = $region25
  $region24: #{gcn_forward.1} parent=0 // pred_region
    _
  $region25: #{gcn_forward.1} parent=0 // pred_fallthru
    _
  %v24 = vld [vmem:[%s1] sm:$0xf]
  %v25 = vld [vmem:[%s1 + $0x4] sm:$0xf]
  %v26 = vld [vmem:[%s1 + $0x8] sm:$0xf]
  %v27 = vld [vmem:[%s1 + $0xc] sm:$0xf]
  %v28 = vld [vmem:[%s1 + $0x10] sm:$0xf]
  %v29 = vld [vmem:[%s1 + $0x14] sm:$0xf]
  %v30 = vld [vmem:[%s1 + $0x18] sm:$0xf]
  %v31 = vld [vmem:[%s1 + $0x1c] sm:$0xf]
  %v32 = vld [vmem:[%s1 + $0x20] sm:$0xf]
  %v33 = vld [vmem:[%s1 + $0x24] sm:$0xf]
  %v34 = vld [vmem:[%s1 + $0x28] sm:$0xf]
  %v35 = vld [vmem:[%s1 + $0x2c] sm:$0xf]
  %v36 = vld [vmem:[%s1 + $0x30] sm:$0xf]
  %v37 = vld [vmem:[%s1 + $0x34] sm:$0xf]
  %v38 = vld [vmem:[%s1 + $0x38] sm:$0xf]
  %v39 = vld [vmem:[%s1 + $0x3c] sm:$0xf]
  %v40 = vld [vmem:[%s2] sm:$0xf]
  %v41 = vld [vmem:[%s2 + $0x4] sm:$0xf]
  %v42 = vld [vmem:[%s2 + $0x8] sm:$0xf]
  %v43 = vld [vmem:[%s2 + $0xc] sm:$0xf]
  %v44 = vld [vmem:[%s2 + $0x10] sm:$0xf]
  %v45 = vld [vmem:[%s2 + $0x14] sm:$0xf]
  %v46 = vld [vmem:[%s2 + $0x18] sm:$0xf]
  %v47 = vld [vmem:[%s2 + $0x1c] sm:$0xf]
  %v48 = vld [vmem:[%s2 + $0x20] sm:$0xf]
  %v49 = vld [vmem:[%s2 + $0x24] sm:$0xf]
  %v50 = vld [vmem:[%s2 + $0x28] sm:$0xf]
  %v51 = vld [vmem:[%s2 + $0x2c] sm:$0xf]
  %v52 = vld [vmem:[%s2 + $0x30] sm:$0xf]
  %v53 = vld [vmem:[%s2 + $0x34] sm:$0xf]
  %v54 = vld [vmem:[%s2 + $0x38] sm:$0xf]
  %v55 = vld [vmem:[%s2 + $0x3c] sm:$0xf]
  %v72 = vunpack.c.l.b16 %v24
  %v73 = vunpack.c.l.b16 %v25
  %v74 = vunpack.c.l.b16 %v26
  %v75 = vunpack.c.l.b16 %v27
  %v76 = vunpack.c.l.b16 %v28
  %v77 = vunpack.c.l.b16 %v29
  %v78 = vunpack.c.l.b16 %v30
  %v79 = vunpack.c.l.b16 %v31
  %v80 = vunpack.c.l.b16 %v32
  %v81 = vunpack.c.l.b16 %v33
  %v82 = vunpack.c.l.b16 %v34
  %v83 = vunpack.c.l.b16 %v35
  %v84 = vunpack.c.l.b16 %v36
  %v85 = vunpack.c.l.b16 %v37
  %v86 = vunpack.c.l.b16 %v38
  %v87 = vunpack.c.l.b16 %v39
  %v88 = vpack.c.b16 %v73, %v72
  %v89 = vpack.c.b16 %v75, %v74
  %v90 = vpack.c.b16 %v77, %v76
  %v91 = vpack.c.b16 %v79, %v78
  %v92 = vpack.c.b16 %v81, %v80
  %v93 = vpack.c.b16 %v83, %v82
  %v94 = vpack.c.b16 %v85, %v84
  %v95 = vpack.c.b16 %v87, %v86
  %v120 = vunpack.c.l.b16 %v40
  %v121 = vunpack.c.l.b16 %v41
  %v122 = vunpack.c.l.b16 %v42
  %v123 = vunpack.c.l.b16 %v43
  %v124 = vunpack.c.l.b16 %v44
  %v125 = vunpack.c.l.b16 %v45
  %v126 = vunpack.c.l.b16 %v46
  %v127 = vunpack.c.l.b16 %v47
  %v128 = vunpack.c.l.b16 %v48
  %v129 = vunpack.c.l.b16 %v49
  %v130 = vunpack.c.l.b16 %v50
  %v131 = vunpack.c.l.b16 %v51
  %v132 = vunpack.c.l.b16 %v52
  %v133 = vunpack.c.l.b16 %v53
  %v134 = vunpack.c.l.b16 %v54
  %v135 = vunpack.c.l.b16 %v55
  %v136 = vpack.c.b16 %v121, %v120
  %v137 = vpack.c.b16 %v123, %v122
  %v138 = vpack.c.b16 %v125, %v124
  %v139 = vpack.c.b16 %v127, %v126
  %v140 = vpack.c.b16 %v129, %v128
  %v141 = vpack.c.b16 %v131, %v130
  %v142 = vpack.c.b16 %v133, %v132
  %v143 = vpack.c.b16 %v135, %v134
  %152 = vmatprep.subr.bf16.mxu0 0
  %153 = vmatpush1.bf16.msra.mxu0 %v136
  %154 = vmatprep.subr.bf16.mxu0 0
  %155 = vmatpush1.bf16.msra.mxu0 %v137
  %156 = vmatprep.subr.bf16.mxu0 0
  %157 = vmatpush1.bf16.msra.mxu0 %v138
  %158 = vmatprep.subr.bf16.mxu0 0
  %159 = vmatpush1.bf16.msra.mxu0 %v139
  %160 = vmatprep.subr.bf16.mxu0 0
  %161 = vmatpush1.bf16.msra.mxu0 %v140
  %162 = vmatprep.subr.bf16.mxu0 0
  %163 = vmatpush1.bf16.msra.mxu0 %v141
  %164 = vmatprep.subr.bf16.mxu0 0
  %165 = vmatpush1.bf16.msra.mxu0 %v142
  %166 = vmatprep.subr.bf16.mxu0 0
  %167 = vmatpush1.bf16.msra.mxu0 %v143
  %168 = vmatprep.subr.bf16.mxu0 0
  %169 = vmatpush1.bf16.msra.mxu0 0
  %170 = vmatprep.subr.bf16.mxu0 0
  %171 = vmatpush1.bf16.msra.mxu0 0
  %172 = vmatprep.subr.bf16.mxu0 0
  %173 = vmatpush1.bf16.msra.mxu0 0
  %174 = vmatprep.subr.bf16.mxu0 0
  %175 = vmatpush1.bf16.msra.mxu0 0
  %176 = vmatprep.subr.bf16.mxu0 0
  %177 = vmatpush1.bf16.msra.mxu0 0
  %178 = vmatprep.subr.bf16.mxu0 0
  %179 = vmatpush1.bf16.msra.mxu0 0
  %180 = vmatprep.subr.bf16.mxu0 0
  %181 = vmatpush1.bf16.msra.mxu0 0
  %182 = vmatprep.subr.bf16.mxu0 0
  %183 = vmatpush1.bf16.msra.mxu0 0
  %184 = vmatprep.mubr.bf16.mxu0 0
  %185 = vmatmul.mubr.bf16.gmra.mrb[0].mxu0 %v88
  %v186 = vpop.f32.mrb[0].mxu0
  %v187 = vadd.f32 0.0, %v186
  %v188 = vpop.f32.mrb[0].mxu0
  %v189 = vpop.f32.mrb[0].mxu0
  %v190 = vadd.f32 0.0, %v189
  %v191 = vpop.f32.mrb[0].mxu0
  %192 = vmatprep.mubr.bf16.mxu0 0
  %193 = vmatmul.mubr.bf16.gmra.mrb[0].mxu0 %v89
  %v194 = vpop.f32.mrb[0].mxu0
  %v195 = vadd.f32 0.0, %v194
  %v196 = vpop.f32.mrb[0].mxu0
  %v197 = vpop.f32.mrb[0].mxu0
  %v198 = vadd.f32 0.0, %v197
  %v199 = vpop.f32.mrb[0].mxu0
  %200 = vmatprep.mubr.bf16.mxu0 0
  %201 = vmatmul.mubr.bf16.gmra.mrb[0].mxu0 %v90
  %v202 = vpop.f32.mrb[0].mxu0
  %v203 = vadd.f32 0.0, %v202
  %v204 = vpop.f32.mrb[0].mxu0
  %v205 = vpop.f32.mrb[0].mxu0
  %v206 = vadd.f32 0.0, %v205
  %v207 = vpop.f32.mrb[0].mxu0
  %208 = vmatprep.mubr.bf16.mxu0 0
  %209 = vmatmul.mubr.bf16.gmra.mrb[0].mxu0 %v91
  %v210 = vpop.f32.mrb[0].mxu0
  %v211 = vadd.f32 0.0, %v210
  %v212 = vpop.f32.mrb[0].mxu0
  %v213 = vpop.f32.mrb[0].mxu0
  %v214 = vadd.f32 0.0, %v213
  %v215 = vpop.f32.mrb[0].mxu0
  %216 = vmatprep.mubr.bf16.mxu0 0
  %217 = vmatmul.mubr.bf16.gmra.mrb[0].mxu0 %v92
  %v218 = vpop.f32.mrb[0].mxu0
  %v219 = vadd.f32 0.0, %v218
  %v220 = vpop.f32.mrb[0].mxu0
  %v221 = vpop.f32.mrb[0].mxu0
  %v222 = vadd.f32 0.0, %v221
  %v223 = vpop.f32.mrb[0].mxu0
  %224 = vmatprep.mubr.bf16.mxu0 0
  %225 = vmatmul.mubr.bf16.gmra.mrb[0].mxu0 %v93
  %v226 = vpop.f32.mrb[0].mxu0
  %v227 = vadd.f32 0.0, %v226
  %v228 = vpop.f32.mrb[0].mxu0
  %v229 = vpop.f32.mrb[0].mxu0
  %v230 = vadd.f32 0.0, %v229
  %v231 = vpop.f32.mrb[0].mxu0
  %232 = vmatprep.mubr.bf16.mxu0 0
  %233 = vmatmul.mubr.bf16.gmra.mrb[0].mxu0 %v94
  %v234 = vpop.f32.mrb[0].mxu0
  %v235 = vadd.f32 0.0, %v234
  %v236 = vpop.f32.mrb[0].mxu0
  %v237 = vpop.f32.mrb[0].mxu0
  %v238 = vadd.f32 0.0, %v237
  %v239 = vpop.f32.mrb[0].mxu0
  %240 = vmatprep.mubr.bf16.mxu0 0
  %241 = vmatmul.mubr.bf16.gmra.mrb[0].mxu0 %v95
  %v242 = vpop.f32.mrb[0].mxu0
  %v243 = vadd.f32 0.0, %v242
  %v244 = vpop.f32.mrb[0].mxu0
  %v245 = vpop.f32.mrb[0].mxu0
  %v246 = vadd.f32 0.0, %v245
  %v247 = vpop.f32.mrb[0].mxu0
  %248 = vdwg.mxu0
  %v249 = vld [vmem:[%s0] sm:$0xf]
  %v250 = vld [vmem:[%s0 + $0x4] sm:$0xf]
  %v251 = vld [vmem:[%s0 + $0x8] sm:$0xf]
  %v252 = vld [vmem:[%s0 + $0xc] sm:$0xf]
  %v253 = vld [vmem:[%s0 + $0x10] sm:$0xf]
  %v254 = vld [vmem:[%s0 + $0x14] sm:$0xf]
  %v255 = vld [vmem:[%s0 + $0x18] sm:$0xf]
  %v256 = vld [vmem:[%s0 + $0x1c] sm:$0xf]
  %v257 = vld [vmem:[%s0 + $0x20] sm:$0xf]
  %v258 = vld [vmem:[%s0 + $0x24] sm:$0xf]
  %v259 = vld [vmem:[%s0 + $0x28] sm:$0xf]
  %v260 = vld [vmem:[%s0 + $0x2c] sm:$0xf]
  %v261 = vld [vmem:[%s0 + $0x30] sm:$0xf]
  %v262 = vld [vmem:[%s0 + $0x34] sm:$0xf]
  %v263 = vld [vmem:[%s0 + $0x38] sm:$0xf]
  %v264 = vld [vmem:[%s0 + $0x3c] sm:$0xf]
  %v265 = vpack.c.bf16 %v190, %v187
  %v266 = vpack.c.bf16 %v198, %v195
  %v267 = vpack.c.bf16 %v206, %v203
  %v268 = vpack.c.bf16 %v214, %v211
  %v269 = vpack.c.bf16 %v222, %v219
  %v270 = vpack.c.bf16 %v230, %v227
  %v271 = vpack.c.bf16 %v238, %v235
  %v272 = vpack.c.bf16 %v246, %v243
  %v273 = vld [vmem:[%s3] sm:$0x1]
  %v275 = vlaneseq
  %v276 = vshrl.u32 %v275, 7
  %v277 = vsub.s32 0, %v276
  %v278 = vrot.slane %v273, %v277
  %v296 = vunpack.c.l.b16 %v249
  %v297 = vunpack.c.l.b16 %v250
  %v298 = vunpack.c.l.b16 %v251
  %v299 = vunpack.c.l.b16 %v252
  %v300 = vunpack.c.l.b16 %v253
  %v301 = vunpack.c.l.b16 %v254
  %v302 = vunpack.c.l.b16 %v255
  %v303 = vunpack.c.l.b16 %v256
  %v304 = vunpack.c.l.b16 %v257
  %v305 = vunpack.c.l.b16 %v258
  %v306 = vunpack.c.l.b16 %v259
  %v307 = vunpack.c.l.b16 %v260
  %v308 = vunpack.c.l.b16 %v261
  %v309 = vunpack.c.l.b16 %v262
  %v310 = vunpack.c.l.b16 %v263
  %v311 = vunpack.c.l.b16 %v264
  %v312 = vpack.c.b16 %v297, %v296
  %v313 = vpack.c.b16 %v299, %v298
  %v314 = vpack.c.b16 %v301, %v300
  %v315 = vpack.c.b16 %v303, %v302
  %v316 = vpack.c.b16 %v305, %v304
  %v317 = vpack.c.b16 %v307, %v306
  %v318 = vpack.c.b16 %v309, %v308
  %v319 = vpack.c.b16 %v311, %v310
  %328 = vmatprep.subr.bf16.mxu0 0
  %329 = vmatpush1.bf16.msra.mxu0 %v265
  %330 = vmatprep.subr.bf16.mxu0 0
  %331 = vmatpush1.bf16.msra.mxu0 %v266
  %332 = vmatprep.subr.bf16.mxu0 0
  %333 = vmatpush1.bf16.msra.mxu0 %v267
  %334 = vmatprep.subr.bf16.mxu0 0
  %335 = vmatpush1.bf16.msra.mxu0 %v268
  %336 = vmatprep.subr.bf16.mxu0 0
  %337 = vmatpush1.bf16.msra.mxu0 %v269
  %338 = vmatprep.subr.bf16.mxu0 0
  %339 = vmatpush1.bf16.msra.mxu0 %v270
  %340 = vmatprep.subr.bf16.mxu0 0
  %341 = vmatpush1.bf16.msra.mxu0 %v271
  %342 = vmatprep.subr.bf16.mxu0 0
  %343 = vmatpush1.bf16.msra.mxu0 %v272
  %344 = vmatprep.subr.bf16.mxu0 0
  %345 = vmatpush1.bf16.msra.mxu0 0
  %346 = vmatprep.subr.bf16.mxu0 0
  %347 = vmatpush1.bf16.msra.mxu0 0
  %348 = vmatprep.subr.bf16.mxu0 0
  %349 = vmatpush1.bf16.msra.mxu0 0
  %350 = vmatprep.subr.bf16.mxu0 0
  %351 = vmatpush1.bf16.msra.mxu0 0
  %352 = vmatprep.subr.bf16.mxu0 0
  %353 = vmatpush1.bf16.msra.mxu0 0
  %354 = vmatprep.subr.bf16.mxu0 0
  %355 = vmatpush1.bf16.msra.mxu0 0
  %356 = vmatprep.subr.bf16.mxu0 0
  %357 = vmatpush1.bf16.msra.mxu0 0
  %358 = vmatprep.subr.bf16.mxu0 0
  %359 = vmatpush1.bf16.msra.mxu0 0
  %360 = vmatprep.mubr.bf16.mxu0 0
  %361 = vmatmul.mubr.bf16.gmra.mrb[0].mxu0 %v312
  %v362 = vpop.f32.mrb[0].mxu0
  %v363 = vadd.f32 %v278, %v362
  %v364 = vpop.f32.mrb[0].mxu0
  %v365 = vpop.f32.mrb[0].mxu0
  %v366 = vadd.f32 %v278, %v365
  %v367 = vpop.f32.mrb[0].mxu0
  %368 = vmatprep.mubr.bf16.mxu0 0
  %369 = vmatmul.mubr.bf16.gmra.mrb[0].mxu0 %v313
  %v370 = vpop.f32.mrb[0].mxu0
  %v371 = vadd.f32 %v278, %v370
  %v372 = vpop.f32.mrb[0].mxu0
  %v373 = vpop.f32.mrb[0].mxu0
  %v374 = vadd.f32 %v278, %v373
  %v375 = vpop.f32.mrb[0].mxu0
  %376 = vmatprep.mubr.bf16.mxu0 0
  %377 = vmatmul.mubr.bf16.gmra.mrb[0].mxu0 %v314
  %v378 = vpop.f32.mrb[0].mxu0
  %v379 = vadd.f32 %v278, %v378
  %v380 = vpop.f32.mrb[0].mxu0
  %v381 = vpop.f32.mrb[0].mxu0
  %v382 = vadd.f32 %v278, %v381
  %v383 = vpop.f32.mrb[0].mxu0
  %384 = vmatprep.mubr.bf16.mxu0 0
  %385 = vmatmul.mubr.bf16.gmra.mrb[0].mxu0 %v315
  %v386 = vpop.f32.mrb[0].mxu0
  %v387 = vadd.f32 %v278, %v386
  %v388 = vpop.f32.mrb[0].mxu0
  %v389 = vpop.f32.mrb[0].mxu0
  %v390 = vadd.f32 %v278, %v389
  %v391 = vpop.f32.mrb[0].mxu0
  %392 = vmatprep.mubr.bf16.mxu0 0
  %393 = vmatmul.mubr.bf16.gmra.mrb[0].mxu0 %v316
  %v394 = vpop.f32.mrb[0].mxu0
  %v395 = vadd.f32 %v278, %v394
  %v396 = vpop.f32.mrb[0].mxu0
  %v397 = vpop.f32.mrb[0].mxu0
  %v398 = vadd.f32 %v278, %v397
  %v399 = vpop.f32.mrb[0].mxu0
  %400 = vmatprep.mubr.bf16.mxu0 0
  %401 = vmatmul.mubr.bf16.gmra.mrb[0].mxu0 %v317
  %v402 = vpop.f32.mrb[0].mxu0
  %v403 = vadd.f32 %v278, %v402
  %v404 = vpop.f32.mrb[0].mxu0
  %v405 = vpop.f32.mrb[0].mxu0
  %v406 = vadd.f32 %v278, %v405
  %v407 = vpop.f32.mrb[0].mxu0
  %408 = vmatprep.mubr.bf16.mxu0 0
  %409 = vmatmul.mubr.bf16.gmra.mrb[0].mxu0 %v318
  %v410 = vpop.f32.mrb[0].mxu0
  %v411 = vadd.f32 %v278, %v410
  %v412 = vpop.f32.mrb[0].mxu0
  %v413 = vpop.f32.mrb[0].mxu0
  %v414 = vadd.f32 %v278, %v413
  %v415 = vpop.f32.mrb[0].mxu0
  %416 = vmatprep.mubr.bf16.mxu0 0
  %417 = vmatmul.mubr.bf16.gmra.mrb[0].mxu0 %v319
  %v418 = vpop.f32.mrb[0].mxu0
  %v419 = vadd.f32 %v278, %v418
  %v420 = vpop.f32.mrb[0].mxu0
  %v421 = vpop.f32.mrb[0].mxu0
  %v422 = vadd.f32 %v278, %v421
  %v423 = vpop.f32.mrb[0].mxu0
  %424 = vdwg.mxu0
  %v425 = vmax.f32 %v363, 0.0
  %v426 = vmax.f32 %v366, 0.0
  %v427 = vmax.f32 %v371, 0.0
  %v428 = vmax.f32 %v374, 0.0
  %v429 = vmax.f32 %v379, 0.0
  %v430 = vmax.f32 %v382, 0.0
  %v431 = vmax.f32 %v387, 0.0
  %v432 = vmax.f32 %v390, 0.0
  %v433 = vmax.f32 %v395, 0.0
  %v434 = vmax.f32 %v398, 0.0
  %v435 = vmax.f32 %v403, 0.0
  %v436 = vmax.f32 %v406, 0.0
  %v437 = vmax.f32 %v411, 0.0
  %v438 = vmax.f32 %v414, 0.0
  %v439 = vmax.f32 %v419, 0.0
  %v440 = vmax.f32 %v422, 0.0
  %v441 = vpack.c.bf16 %v426, %v425
  %v442 = vpack.c.bf16 %v428, %v427
  %v443 = vpack.c.bf16 %v430, %v429
  %v444 = vpack.c.bf16 %v432, %v431
  %v445 = vpack.c.bf16 %v434, %v433
  %v446 = vpack.c.bf16 %v436, %v435
  %v447 = vpack.c.bf16 %v438, %v437
  %v448 = vpack.c.bf16 %v440, %v439
  %v449 = vld [vmem:[%s4] sm:$0xf]
  %v450 = vld [vmem:[%s4 + $0x4] sm:$0xf]
  %v451 = vld [vmem:[%s4 + $0x8] sm:$0xf]
  %v452 = vld [vmem:[%s4 + $0xc] sm:$0xf]
  %v453 = vld [vmem:[%s4 + $0x10] sm:$0xf]
  %v454 = vld [vmem:[%s4 + $0x14] sm:$0xf]
  %v455 = vld [vmem:[%s4 + $0x18] sm:$0xf]
  %v456 = vld [vmem:[%s4 + $0x1c] sm:$0xf]
  %v457 = vld [vmem:[%s4 + $0x20] sm:$0xf]
  %v458 = vld [vmem:[%s4 + $0x24] sm:$0xf]
  %v459 = vld [vmem:[%s4 + $0x28] sm:$0xf]
  %v460 = vld [vmem:[%s4 + $0x2c] sm:$0xf]
  %v461 = vld [vmem:[%s4 + $0x30] sm:$0xf]
  %v462 = vld [vmem:[%s4 + $0x34] sm:$0xf]
  %v463 = vld [vmem:[%s4 + $0x38] sm:$0xf]
  %v464 = vld [vmem:[%s4 + $0x3c] sm:$0xf]
  %v481 = vunpack.c.l.b16 %v449
  %v482 = vunpack.c.l.b16 %v450
  %v483 = vunpack.c.l.b16 %v451
  %v484 = vunpack.c.l.b16 %v452
  %v485 = vunpack.c.l.b16 %v453
  %v486 = vunpack.c.l.b16 %v454
  %v487 = vunpack.c.l.b16 %v455
  %v488 = vunpack.c.l.b16 %v456
  %v489 = vunpack.c.l.b16 %v457
  %v490 = vunpack.c.l.b16 %v458
  %v491 = vunpack.c.l.b16 %v459
  %v492 = vunpack.c.l.b16 %v460
  %v493 = vunpack.c.l.b16 %v461
  %v494 = vunpack.c.l.b16 %v462
  %v495 = vunpack.c.l.b16 %v463
  %v496 = vunpack.c.l.b16 %v464
  %v497 = vpack.c.b16 %v482, %v481
  %v498 = vpack.c.b16 %v484, %v483
  %v499 = vpack.c.b16 %v486, %v485
  %v500 = vpack.c.b16 %v488, %v487
  %v501 = vpack.c.b16 %v490, %v489
  %v502 = vpack.c.b16 %v492, %v491
  %v503 = vpack.c.b16 %v494, %v493
  %v504 = vpack.c.b16 %v496, %v495
  %513 = vmatprep.subr.bf16.mxu0 0
  %514 = vmatpush1.bf16.msra.mxu0 %v497
  %515 = vmatprep.subr.bf16.mxu0 0
  %516 = vmatpush1.bf16.msra.mxu0 %v498
  %517 = vmatprep.subr.bf16.mxu0 0
  %518 = vmatpush1.bf16.msra.mxu0 %v499
  %519 = vmatprep.subr.bf16.mxu0 0
  %520 = vmatpush1.bf16.msra.mxu0 %v500
  %521 = vmatprep.subr.bf16.mxu0 0
  %522 = vmatpush1.bf16.msra.mxu0 %v501
  %523 = vmatprep.subr.bf16.mxu0 0
  %524 = vmatpush1.bf16.msra.mxu0 %v502
  %525 = vmatprep.subr.bf16.mxu0 0
  %526 = vmatpush1.bf16.msra.mxu0 %v503
  %527 = vmatprep.subr.bf16.mxu0 0
  %528 = vmatpush1.bf16.msra.mxu0 %v504
  %529 = vmatprep.subr.bf16.mxu0 0
  %530 = vmatpush1.bf16.msra.mxu0 0
  %531 = vmatprep.subr.bf16.mxu0 0
  %532 = vmatpush1.bf16.msra.mxu0 0
  %533 = vmatprep.subr.bf16.mxu0 0
  %534 = vmatpush1.bf16.msra.mxu0 0
  %535 = vmatprep.subr.bf16.mxu0 0
  %536 = vmatpush1.bf16.msra.mxu0 0
  %537 = vmatprep.subr.bf16.mxu0 0
  %538 = vmatpush1.bf16.msra.mxu0 0
  %539 = vmatprep.subr.bf16.mxu0 0
  %540 = vmatpush1.bf16.msra.mxu0 0
  %541 = vmatprep.subr.bf16.mxu0 0
  %542 = vmatpush1.bf16.msra.mxu0 0
  %543 = vmatprep.subr.bf16.mxu0 0
  %544 = vmatpush1.bf16.msra.mxu0 0
  %545 = vmatprep.mubr.bf16.mxu0 0
  %546 = vmatmul.mubr.bf16.gmra.mrb[0].mxu0 %v441
  %v547 = vpop.f32.mrb[0].mxu0
  %v548 = vadd.f32 0.0, %v547
  %v549 = vpop.f32.mrb[0].mxu0
  %v550 = vpop.f32.mrb[0].mxu0
  %v551 = vadd.f32 0.0, %v550
  %v552 = vpop.f32.mrb[0].mxu0
  %553 = vmatprep.mubr.bf16.mxu0 0
  %554 = vmatmul.mubr.bf16.gmra.mrb[0].mxu0 %v442
  %v555 = vpop.f32.mrb[0].mxu0
  %v556 = vadd.f32 0.0, %v555
  %v557 = vpop.f32.mrb[0].mxu0
  %v558 = vpop.f32.mrb[0].mxu0
  %v559 = vadd.f32 0.0, %v558
  %v560 = vpop.f32.mrb[0].mxu0
  %561 = vmatprep.mubr.bf16.mxu0 0
  %562 = vmatmul.mubr.bf16.gmra.mrb[0].mxu0 %v443
  %v563 = vpop.f32.mrb[0].mxu0
  %v564 = vadd.f32 0.0, %v563
  %v565 = vpop.f32.mrb[0].mxu0
  %v566 = vpop.f32.mrb[0].mxu0
  %v567 = vadd.f32 0.0, %v566
  %v568 = vpop.f32.mrb[0].mxu0
  %569 = vmatprep.mubr.bf16.mxu0 0
  %570 = vmatmul.mubr.bf16.gmra.mrb[0].mxu0 %v444
  %v571 = vpop.f32.mrb[0].mxu0
  %v572 = vadd.f32 0.0, %v571
  %v573 = vpop.f32.mrb[0].mxu0
  %v574 = vpop.f32.mrb[0].mxu0
  %v575 = vadd.f32 0.0, %v574
  %v576 = vpop.f32.mrb[0].mxu0
  %577 = vmatprep.mubr.bf16.mxu0 0
  %578 = vmatmul.mubr.bf16.gmra.mrb[0].mxu0 %v445
  %v579 = vpop.f32.mrb[0].mxu0
  %v580 = vadd.f32 0.0, %v579
  %v581 = vpop.f32.mrb[0].mxu0
  %v582 = vpop.f32.mrb[0].mxu0
  %v583 = vadd.f32 0.0, %v582
  %v584 = vpop.f32.mrb[0].mxu0
  %585 = vmatprep.mubr.bf16.mxu0 0
  %586 = vmatmul.mubr.bf16.gmra.mrb[0].mxu0 %v446
  %v587 = vpop.f32.mrb[0].mxu0
  %v588 = vadd.f32 0.0, %v587
  %v589 = vpop.f32.mrb[0].mxu0
  %v590 = vpop.f32.mrb[0].mxu0
  %v591 = vadd.f32 0.0, %v590
  %v592 = vpop.f32.mrb[0].mxu0
  %593 = vmatprep.mubr.bf16.mxu0 0
  %594 = vmatmul.mubr.bf16.gmra.mrb[0].mxu0 %v447
  %v595 = vpop.f32.mrb[0].mxu0
  %v596 = vadd.f32 0.0, %v595
  %v597 = vpop.f32.mrb[0].mxu0
  %v598 = vpop.f32.mrb[0].mxu0
  %v599 = vadd.f32 0.0, %v598
  %v600 = vpop.f32.mrb[0].mxu0
  %601 = vmatprep.mubr.bf16.mxu0 0
  %602 = vmatmul.mubr.bf16.gmra.mrb[0].mxu0 %v448
  %v603 = vpop.f32.mrb[0].mxu0
  %v604 = vadd.f32 0.0, %v603
  %v605 = vpop.f32.mrb[0].mxu0
  %v606 = vpop.f32.mrb[0].mxu0
  %v607 = vadd.f32 0.0, %v606
  %v608 = vpop.f32.mrb[0].mxu0
  %609 = vdwg.mxu0
  %v610 = vpack.c.bf16 %v551, %v548
  %v611 = vpack.c.bf16 %v559, %v556
  %v612 = vpack.c.bf16 %v567, %v564
  %v613 = vpack.c.bf16 %v575, %v572
  %v614 = vpack.c.bf16 %v583, %v580
  %v615 = vpack.c.bf16 %v591, %v588
  %v616 = vpack.c.bf16 %v599, %v596
  %v617 = vpack.c.bf16 %v607, %v604
  %v618 = vld [vmem:[%s5] sm:$0x1]
  %v620 = vlaneseq
  %v621 = vshrl.u32 %v620, 7
  %v622 = vsub.s32 0, %v621
  %v623 = vrot.slane %v618, %v622
  %625 = vmatprep.subr.bf16.mxu0 0
  %626 = vmatpush1.bf16.msra.mxu0 %v610
  %627 = vmatprep.subr.bf16.mxu0 0
  %628 = vmatpush1.bf16.msra.mxu0 %v611
  %629 = vmatprep.subr.bf16.mxu0 0
  %630 = vmatpush1.bf16.msra.mxu0 %v612
  %631 = vmatprep.subr.bf16.mxu0 0
  %632 = vmatpush1.bf16.msra.mxu0 %v613
  %633 = vmatprep.subr.bf16.mxu0 0
  %634 = vmatpush1.bf16.msra.mxu0 %v614
  %635 = vmatprep.subr.bf16.mxu0 0
  %636 = vmatpush1.bf16.msra.mxu0 %v615
  %637 = vmatprep.subr.bf16.mxu0 0
  %638 = vmatpush1.bf16.msra.mxu0 %v616
  %639 = vmatprep.subr.bf16.mxu0 0
  %640 = vmatpush1.bf16.msra.mxu0 %v617
  %641 = vmatprep.subr.bf16.mxu0 0
  %642 = vmatpush1.bf16.msra.mxu0 0
  %643 = vmatprep.subr.bf16.mxu0 0
  %644 = vmatpush1.bf16.msra.mxu0 0
  %645 = vmatprep.subr.bf16.mxu0 0
  %646 = vmatpush1.bf16.msra.mxu0 0
  %647 = vmatprep.subr.bf16.mxu0 0
  %648 = vmatpush1.bf16.msra.mxu0 0
  %649 = vmatprep.subr.bf16.mxu0 0
  %650 = vmatpush1.bf16.msra.mxu0 0
  %651 = vmatprep.subr.bf16.mxu0 0
  %652 = vmatpush1.bf16.msra.mxu0 0
  %653 = vmatprep.subr.bf16.mxu0 0
  %654 = vmatpush1.bf16.msra.mxu0 0
  %655 = vmatprep.subr.bf16.mxu0 0
  %656 = vmatpush1.bf16.msra.mxu0 0
  %657 = vmatprep.mubr.bf16.mxu0 0
  %658 = vmatmul.mubr.bf16.gmra.mrb[0].mxu0 %v312
  %v659 = vpop.f32.mrb[0].mxu0
  %v660 = vadd.f32 %v623, %v659
  %v661 = vpop.f32.mrb[0].mxu0
  %v662 = vpop.f32.mrb[0].mxu0
  %v663 = vadd.f32 %v623, %v662
  %v664 = vpop.f32.mrb[0].mxu0
  %665 = vmatprep.mubr.bf16.mxu0 0
  %666 = vmatmul.mubr.bf16.gmra.mrb[0].mxu0 %v313
  %v667 = vpop.f32.mrb[0].mxu0
  %v668 = vadd.f32 %v623, %v667
  %v669 = vpop.f32.mrb[0].mxu0
  %v670 = vpop.f32.mrb[0].mxu0
  %v671 = vadd.f32 %v623, %v670
  %v672 = vpop.f32.mrb[0].mxu0
  %673 = vmatprep.mubr.bf16.mxu0 0
  %674 = vmatmul.mubr.bf16.gmra.mrb[0].mxu0 %v314
  %v675 = vpop.f32.mrb[0].mxu0
  %v676 = vadd.f32 %v623, %v675
  %v677 = vpop.f32.mrb[0].mxu0
  %v678 = vpop.f32.mrb[0].mxu0
  %v679 = vadd.f32 %v623, %v678
  %v680 = vpop.f32.mrb[0].mxu0
  %681 = vmatprep.mubr.bf16.mxu0 0
  %682 = vmatmul.mubr.bf16.gmra.mrb[0].mxu0 %v315
  %v683 = vpop.f32.mrb[0].mxu0
  %v684 = vadd.f32 %v623, %v683
  %v685 = vpop.f32.mrb[0].mxu0
  %v686 = vpop.f32.mrb[0].mxu0
  %v687 = vadd.f32 %v623, %v686
  %v688 = vpop.f32.mrb[0].mxu0
  %689 = vmatprep.mubr.bf16.mxu0 0
  %690 = vmatmul.mubr.bf16.gmra.mrb[0].mxu0 %v316
  %v691 = vpop.f32.mrb[0].mxu0
  %v692 = vadd.f32 %v623, %v691
  %v693 = vpop.f32.mrb[0].mxu0
  %v694 = vpop.f32.mrb[0].mxu0
  %v695 = vadd.f32 %v623, %v694
  %v696 = vpop.f32.mrb[0].mxu0
  %697 = vmatprep.mubr.bf16.mxu0 0
  %698 = vmatmul.mubr.bf16.gmra.mrb[0].mxu0 %v317
  %v699 = vpop.f32.mrb[0].mxu0
  %v700 = vadd.f32 %v623, %v699
  %v701 = vpop.f32.mrb[0].mxu0
  %v702 = vpop.f32.mrb[0].mxu0
  %v703 = vadd.f32 %v623, %v702
  %v704 = vpop.f32.mrb[0].mxu0
  %705 = vmatprep.mubr.bf16.mxu0 0
  %706 = vmatmul.mubr.bf16.gmra.mrb[0].mxu0 %v318
  %v707 = vpop.f32.mrb[0].mxu0
  %v708 = vadd.f32 %v623, %v707
  %v709 = vpop.f32.mrb[0].mxu0
  %v710 = vpop.f32.mrb[0].mxu0
  %v711 = vadd.f32 %v623, %v710
  %v712 = vpop.f32.mrb[0].mxu0
  %713 = vmatprep.mubr.bf16.mxu0 0
  %714 = vmatmul.mubr.bf16.gmra.mrb[0].mxu0 %v319
  %v715 = vpop.f32.mrb[0].mxu0
  %v716 = vadd.f32 %v623, %v715
  %v717 = vpop.f32.mrb[0].mxu0
  %v718 = vpop.f32.mrb[0].mxu0
  %v719 = vadd.f32 %v623, %v718
  %v720 = vpop.f32.mrb[0].mxu0
  %721 = vdwg.mxu0
  %722 = vst [vmem:[%s6] sm:$0xff] %v660
  %723 = vst [vmem:[%s6 + $0x8] sm:$0xff] %v663
  %724 = vst [vmem:[%s6 + $0x10] sm:$0xff] %v668
  %725 = vst [vmem:[%s6 + $0x18] sm:$0xff] %v671
  %726 = vst [vmem:[%s6 + $0x20] sm:$0xff] %v676
  %727 = vst [vmem:[%s6 + $0x28] sm:$0xff] %v679
  %728 = vst [vmem:[%s6 + $0x30] sm:$0xff] %v684
  %729 = vst [vmem:[%s6 + $0x38] sm:$0xff] %v687
  %730 = vst [vmem:[%s6 + $0x40] sm:$0xff] %v692
  %731 = vst [vmem:[%s6 + $0x48] sm:$0xff] %v695
  %732 = vst [vmem:[%s6 + $0x50] sm:$0xff] %v700
  %733 = vst [vmem:[%s6 + $0x58] sm:$0xff] %v703
  %734 = vst [vmem:[%s6 + $0x60] sm:$0xff] %v708
  %735 = vst [vmem:[%s6 + $0x68] sm:$0xff] %v711
  %736 = vst [vmem:[%s6 + $0x70] sm:$0xff] %v716
  %737 = vst [vmem:[%s6 + $0x78] sm:$0xff] %v719
  // Predicated region
  $region26: #{gcn_forward.1} parent=0 // pred_check
    _
  $region27: #{gcn_forward.1} parent=0 // pred_check_branch
    %739 = sbr.rel (0) target = $region29
  $region28: #{gcn_forward.1} parent=0 // pred_region
    _
  $region29: #{gcn_forward.1} parent=0 // pred_fallthru
    _
  // Predicated region
  $region30: #{gcn_forward.1} parent=0 // pred_check
    _
  $region31: #{gcn_forward.1} parent=0 // pred_check_branch
    %741 = sbr.rel (0) target = $region33
  $region32: #{gcn_forward.1} parent=0 // pred_region
    _
  $region33: #{gcn_forward.1} parent=0 // pred_fallthru
    _

</llo_original>
